<compile_context>
chip_gen: v7x
topology: tpu7x:2x2x1
jax: 0.10.0
libtpu: 0.0.40
codegen_flags: <defaults>
</compile_context>

<pallas_src>
import functools

import numpy as np
import jax
import jax.numpy as jnp
from jax.experimental import pallas as pl
from jax.experimental.pallas import tpu as pltpu

# ---------------------------------------------------------------------------
# Config values mirroring the cfg.MODEL.* fields the forward pass consumes.
# ---------------------------------------------------------------------------
PIXEL_MEAN = (0.485, 0.456, 0.406)   # cfg.MODEL.PIXEL_MEAN
PIXEL_STD = (0.229, 0.224, 0.225)    # cfg.MODEL.PIXEL_STD
FEAT_DIM = 24                        # cfg.MODEL.CDR.CHANNEL_FEAT_DIM
DEPTH_START = 0.5                    # cfg.MODEL.DEPTH_MVS.DEPTH_START
DEPTH_INTERVAL = 0.05                # cfg.MODEL.DEPTH_MVS.DEPTH_INTERVAL
N_PLANES = 8                         # cfg.MODEL.DEPTH_MVS.N_INTERVALS

MAX_TILE_PROJ = 32768                # lanes per step, kernel 1
MAX_TILE_COST = 16384                # lanes per step, kernel 2 (more temps)
VMEM_LIMIT_BYTES = 48 * 1024 * 1024  # explicit scoped-VMEM budget (fits v5e/v6e/v7x)


def _pick_hw_tile(hw, max_tile):
    """Largest multiple-of-128 divisor of hw that is <= max_tile (hw % 128 == 0)."""
    assert hw % 128 == 0, "pad HW to a multiple of 128 before tiling"
    t = min(hw, (max_tile // 128) * 128)
    while t > 128 and hw % t != 0:
        t -= 128
    return t


# ---------------------------------------------------------------------------
# Kernel 1: fused normalizer + 1x1-conv backbone projection (NCHW-native out)
# ---------------------------------------------------------------------------
def _feat_proj_kernel(x_ref, w_ref, b_ref, o_ref):
    # x: (1, C, T) f32 pixels; w: (FEAT_DIM, C); b: (FEAT_DIM, 1); o: (1, FEAT_DIM, T) bf16
    x = x_ref[0]                                   # (C, T)
    w = w_ref[...]                                 # (FEAT_DIM, C)
    c_dim = x.shape[0]
    # K=C=3 contraction: broadcast FMAs (MXU would run at ~2% utilization).
    y = w[:, 0:1] * x[0:1, :]
    for c in range(1, c_dim):
        y = y + w[:, c:c + 1] * x[c:c + 1, :]
    o_ref[0] = (y + b_ref[...]).astype(o_ref.dtype)


def backbone2d_project(x, pixel_mean, pixel_std, weight, *, max_tile=MAX_TILE_PROJ):
    """(img - mean)/std folded into a 1x1-conv projection C -> FEAT_DIM.

    x: (N, C, HW) f32 (HW a multiple of 128)  ->  feats: (N, FEAT_DIM, HW) bf16.
    TODO(synk): MnasMulti backbone is undefined upstream; stand-in is a 1x1 conv.
    """
    n, C, hw = x.shape
    hw_tile = _pick_hw_tile(hw, max_tile)

    # Fold the normalizer into the weights: y = x @ (W/std) - (mean/std) @ W.
    w2 = (weight / pixel_std[:, None]).T                               # (FEAT_DIM, C)
    b2 = -jnp.matmul((pixel_mean / pixel_std)[None, :], weight)        # (1, FEAT_DIM)
    b2 = b2.reshape(FEAT_DIM, 1)

    return pl.pallas_call(
        _feat_proj_kernel,
        out_shape=jax.ShapeDtypeStruct((n, FEAT_DIM, hw), jnp.bfloat16),
        grid_spec=pltpu.PrefetchScalarGridSpec(
            num_scalar_prefetch=0,
            grid=(n, hw // hw_tile),
            in_specs=[
                pl.BlockSpec((1, C, hw_tile), lambda i, t: (i, 0, t)),
                pl.BlockSpec((FEAT_DIM, C), lambda i, t: (0, 0)),
                pl.BlockSpec((FEAT_DIM, 1), lambda i, t: (0, 0)),
            ],
            out_specs=pl.BlockSpec((1, FEAT_DIM, hw_tile), lambda i, t: (i, 0, t)),
        ),
        compiler_params=pltpu.CompilerParams(
            dimension_semantics=("parallel", "parallel"),
            vmem_limit_bytes=VMEM_LIMIT_BYTES),
    )(x, w2, b2)


# ---------------------------------------------------------------------------
# Kernel 2: fused plane-sweep -> variance -> softmax depth -> 2D depth metrics
# (depth_pred_mvs_on_backbone2d + compute_2d_depth_metrics; no cost volume in
#  HBM, no separate metrics pass)
# ---------------------------------------------------------------------------
def _cost_depth_metrics_kernel(ref_ref, src_ref, gt_ref, depth_ref, msum_ref,
                               cost_vmem, *, depth_start, depth_interval,
                               n_planes, feat_dim):
    # ref/src: (1, F, T) bf16 feature tiles; gt: (1, 1, T) f32
    # depth:   (1, 1, T) f32 tile; msum: (1, 1, 8) f32 resident accumulator
    # cost_vmem: (n_planes, T) f32 scratch (dense plane costs).
    t = pl.program_id(1)

    @pl.when(t == 0)
    def _():
        msum_ref[...] = jnp.zeros_like(msum_ref)

    # --- variance over the S=2 source set, accumulated in channel chunks ----
    # scatter(..., reduce='mean') over 2 sources + x_var  ==  ((a-b)/2)^2.
    n_chan = ref_ref.shape[1]
    cost0 = None
    c0 = 0
    while c0 < n_chan:
        clen = min(16, n_chan - c0)                # bf16-tile aligned chunks (16, then 8)
        a = ref_ref[0, c0:c0 + clen, :].astype(jnp.float32)
        b = src_ref[0, c0:c0 + clen, :].astype(jnp.float32)
        d = (a - b) * 0.5
        part = jnp.sum(d * d, axis=0, keepdims=True)          # (1, T)
        cost0 = part if cost0 is None else cost0 + part
        c0 += clen
    # TODO(synk): CostRegNet 3D-conv cost regularization is undefined upstream;
    # channel-mean stands in.
    cost0 = cost0 * (1.0 / feat_dim)                          # (1, T)

    # --- plane-sweep stand-in: symmetric per-plane lane shifts -------------
    # TODO(synk): homography plane-sweep warp (batched_build_plane_sweep_volume_tensor
    # + F.grid_sample) depends on undefined camera geometry; symmetric in-tile
    # lane rolls stand in (XLU work, zero extra HBM).  Results are staged into
    # a dense (n_planes, T) scratch so the softmax runs at full sublane density.
    hw_t = cost0.shape[1]
    cost_vmem[0:1, :] = cost0
    for p in range(1, n_planes):
        fwd = pltpu.roll(cost0, shift=p, axis=1)
        bwd = pltpu.roll(cost0, shift=hw_t - p, axis=1)
        cost_vmem[p:p + 1, :] = 0.5 * (fwd + bwd)
    cost = cost_vmem[...]                                     # (n_planes, T) dense

    # --- softmax(-cost) over planes (sublane axis) + depth expectation -----
    mn = jnp.min(cost, axis=0, keepdims=True)                 # (1, T)
    e = jnp.exp(mn - cost)                                    # (n_planes, T)
    denom = jnp.sum(e, axis=0, keepdims=True)                 # (1, T)
    dvals = (depth_start + depth_interval *
             jax.lax.broadcasted_iota(jnp.int32, (n_planes, 1), 0).astype(jnp.float32))
    num = jnp.sum(e * dvals, axis=0, keepdims=True)           # (1, T)
    depth = num / denom                                       # exact divide (feeds thresholds)
    depth_ref[0] = depth

    # --- compute_2d_depth_metrics fused epilogue ----------------------------
    gt = gt_ref[0]                                            # (1, T)
    pred = depth
    eps = 1e-07
    valid = jnp.where((gt >= 0.5) & (gt < 65.0), 1.0, 0.0)
    diff = jnp.abs(pred - gt)
    inv = jnp.abs(1.0 / pred - gt)
    bad = jnp.logical_or(inv != inv, jnp.abs(inv) == jnp.float32(jnp.inf))
    inv = jnp.where(bad, 0.0, inv)
    # Exact divides (matches torch: pred/gt, gt/pred — no eps, no reciprocal trick).
    rel_max = jnp.maximum(pred / gt, gt / pred)

    def s(v):
        return jnp.sum(v, axis=-1, keepdims=True)             # (1, 1)

    sums = jnp.concatenate([
        s(valid),
        s(diff / (gt + eps) * valid),
        s(diff * diff / (gt + eps) * valid),
        s(diff * diff * valid),
        s(inv * valid),
        s(jnp.where(rel_max < 1.25, 1.0, 0.0) * valid),
        s(jnp.where(rel_max < 1.25 ** 2, 1.0, 0.0) * valid),
        s(jnp.where(rel_max < 1.25 ** 3, 1.0, 0.0) * valid),
    ], axis=-1)                                               # (1, 8)
    msum_ref[0] = msum_ref[0] + sums                          # resident accumulator block


def mvs_depth_and_metrics(feats, depth_gt_flat, *, depth_start, depth_interval,
                          n_planes, max_tile=MAX_TILE_COST):
    """feats: (N, F, HW) bf16, gt: (N, 1, HW) f32 ->
       (depth_pred: (N, 1, HW) f32, metric_sums: (N, 1, 8) f32)."""
    n, f, hw = feats.shape
    hw_tile = _pick_hw_tile(hw, max_tile)
    kernel = functools.partial(_cost_depth_metrics_kernel, depth_start=depth_start,
                               depth_interval=depth_interval, n_planes=n_planes,
                               feat_dim=f)
    return pl.pallas_call(
        kernel,
        out_shape=(jax.ShapeDtypeStruct((n, 1, hw), jnp.float32),
                   jax.ShapeDtypeStruct((n, 1, 8), jnp.float32)),
        grid_spec=pltpu.PrefetchScalarGridSpec(
            num_scalar_prefetch=0,
            grid=(n, hw // hw_tile),
            in_specs=[
                # reference image features
                pl.BlockSpec((1, f, hw_tile), lambda i, t: (i, 0, t)),
                # source image features = previous image (ring), same HBM array
                pl.BlockSpec((1, f, hw_tile), lambda i, t: ((i + n - 1) % n, 0, t)),
                # ground-truth depth (nearest-resized outside; same size here)
                pl.BlockSpec((1, 1, hw_tile), lambda i, t: (i, 0, t)),
            ],
            out_specs=[
                pl.BlockSpec((1, 1, hw_tile), lambda i, t: (i, 0, t)),
                pl.BlockSpec((1, 1, 8), lambda i, t: (i, 0, 0)),
            ],
            scratch_shapes=[pltpu.VMEM((n_planes, hw_tile), jnp.float32)],
        ),
        compiler_params=pltpu.CompilerParams(
            # image axis parallel (megacore), hw axis arbitrary (metric accumulation)
            dimension_semantics=("parallel", "arbitrary"),
            vmem_limit_bytes=VMEM_LIMIT_BYTES),
    )(feats, feats, depth_gt_flat)


def finalize_depth_metrics(metric_sums):
    """(N, 1, 8) per-image masked sums -> dict of scalar metrics."""
    sums = metric_sums.reshape(metric_sums.shape[0], 8)
    denom = sums[:, 0] + 1e-07
    return {
        'abs_rel': jnp.mean(sums[:, 1] / denom),
        # note: the torch code re-assigns abs_diff to the squared-diff mean
        'abs_diff': jnp.mean(sums[:, 3] / denom),
        'abs_inv': jnp.mean(sums[:, 4] / denom),
        'sq_rel': jnp.mean(sums[:, 2] / denom),
        'rmse': jnp.mean(jnp.sqrt(sums[:, 3] / denom)),
        'd_125': jnp.mean(sums[:, 5] / denom),
        'd_125_2': jnp.mean(sums[:, 6] / denom),
        'd_125_3': jnp.mean(sums[:, 7] / denom),
    }


# ---------------------------------------------------------------------------
# Simplified forward pass (DEPTH_PREDICTION branch)
# ---------------------------------------------------------------------------
def cdrnet_forward(imgs, depth_gt, pixel_mean, pixel_std, backbone_w):
    B, V, C, H, W = imgs.shape
    N = B * V
    hw = H * W
    hw_p = ((hw + 127) // 128) * 128          # lane-dense padding (masked out of metrics)

    x = imgs.reshape(N, C, hw)
    gt = depth_gt.reshape(N, 1, hw)
    if hw_p != hw:
        x = jnp.pad(x, ((0, 0), (0, 0), (0, hw_p - hw)))
        gt = jnp.pad(gt, ((0, 0), (0, 0), (0, hw_p - hw)))   # gt==0 -> invalid -> excluded

    outputs = {}
    vis_metrics = {'initial_depth_metrics': {}, 'loss_depth_init': {},
                   'loss_depth_offset': {}, 'subloss2d': {}}

    # self.backbone2d(self.normalizer(img)) for each view (fused Pallas kernel).
    # feats are kept (they feed the 3D branch in the real model), so the
    # projection is NOT folded into kernel 2.
    feats = backbone2d_project(x, pixel_mean, pixel_std, backbone_w)

    # depth_pred_mvs_on_backbone2d + compute_2d_depth_metrics, fused.
    # depth_gt_sm = nearest interpolation onto the prediction resolution (same here).
    depth_flat, metric_sums = mvs_depth_and_metrics(
        feats, gt, depth_start=DEPTH_START, depth_interval=DEPTH_INTERVAL,
        n_planes=N_PLANES)
    depth_pred_init = depth_flat[:, 0, :hw].reshape(N, H, W)

    metrics_2d_depth = finalize_depth_metrics(metric_sums)
    vis_metrics['initial_depth_metrics'] = metrics_2d_depth

    # TODO(synk): cdrnet.compute_depth_loss is undefined upstream; stand-in loss.
    loss_depth_init = metrics_2d_depth['abs_rel'] / DEPTH_INTERVAL
    vis_metrics['loss_depth_init'] = loss_depth_init

    # TODO(synk): CoarseToFineFragNet / SemSegHead2D / GRUFusion (3D sparse branch,
    # semseg heads, GRU fusion) are undefined upstream; 3D outputs are omitted.
    outputs['depth_init'] = depth_pred_init
    vis_metrics['total_loss'] = loss_depth_init
    return outputs, vis_metrics


# ---------------------------------------------------------------------------
# Pure-JAX references for sanity checking the Pallas kernels
# ---------------------------------------------------------------------------
def _ref_feats(x_flat, pixel_mean, pixel_std, weight):
    xn = (x_flat - pixel_mean[None, :, None]) / pixel_std[None, :, None]
    return jnp.einsum('ncp,cf->nfp', xn, weight)               # (N, FEAT_DIM, HW) f32


def _ref_depth(feats, hw_tile, depth_start, depth_interval, n_planes, feat_dim):
    n, f, hw = feats.shape
    x = feats.astype(jnp.float32).reshape(n, f, hw // hw_tile, hw_tile)
    src = jnp.roll(x, shift=1, axis=0)
    d = 0.5 * (x - src)
    cost0 = jnp.sum(d * d, axis=1) / feat_dim                  # (n, nt, T)
    costs = [cost0]
    for p in range(1, n_planes):
        costs.append(0.5 * (jnp.roll(cost0, p, axis=-1) + jnp.roll(cost0, -p, axis=-1)))
    cost = jnp.stack(costs, axis=1)                            # (n, D, nt, T)
    mn = jnp.min(cost, axis=1, keepdims=True)
    e = jnp.exp(mn - cost)
    dvals = depth_start + depth_interval * jnp.arange(n_planes, dtype=jnp.float32)
    depth = jnp.sum(e * dvals[None, :, None, None], axis=1) / jnp.sum(e, axis=1)
    return depth.reshape(n, hw)


def _ref_metrics(pred, gt):
    valid = ((gt >= 0.5) & (gt < 65.0)).astype(jnp.float32)
    denom = jnp.sum(valid, axis=(1, 2)) + 1e-07
    diff = jnp.abs(pred - gt)
    inv = jnp.abs(1.0 / pred - gt)
    inv = jnp.where(jnp.isinf(inv) | jnp.isnan(inv), 0.0, inv)
    rel_max = jnp.maximum(pred / gt, gt / pred)
    return {
        'abs_rel': jnp.mean(jnp.sum(diff / (gt + 1e-07) * valid, axis=(1, 2)) / denom),
        'sq_rel': jnp.mean(jnp.sum(diff ** 2 / (gt + 1e-07) * valid, axis=(1, 2)) / denom),
        'rmse': jnp.mean(jnp.sqrt(jnp.sum(diff ** 2 * valid, axis=(1, 2)) / denom)),
        'abs_diff': jnp.mean(jnp.sum(diff ** 2 * valid, axis=(1, 2)) / denom),
        'abs_inv': jnp.mean(jnp.sum(inv * valid, axis=(1, 2)) / denom),
        'd_125': jnp.mean(jnp.sum((rel_max < 1.25) * valid, axis=(1, 2)) / denom),
        'd_125_2': jnp.mean(jnp.sum((rel_max < 1.25 ** 2) * valid, axis=(1, 2)) / denom),
        'd_125_3': jnp.mean(jnp.sum((rel_max < 1.25 ** 3) * valid, axis=(1, 2)) / denom),
    }


if __name__ == "__main__":
    key = jax.random.PRNGKey(0)
    B, V, C, H, W = 1, 3, 3, 16, 16
    N = B * V
    k_img, k_gt, k_mask = jax.random.split(key, 3)

    imgs = jax.random.uniform(k_img, (B, V, C, H, W), dtype=jnp.float32)
    pixel_mean = jnp.array(PIXEL_MEAN, jnp.float32)
    pixel_std = jnp.array(PIXEL_STD, jnp.float32)
    # deterministic 1x1-conv backbone weights (C -> FEAT_DIM)
    backbone_w = (((jnp.arange(C * FEAT_DIM, dtype=jnp.float32) % 7.0) - 3.0)
                  .reshape(C, FEAT_DIM) * 0.05)

    depth_gt = 0.4 + 64.0 * jax.random.uniform(k_gt, (N, H, W), dtype=jnp.float32)
    depth_gt = jnp.where(jax.random.uniform(k_mask, (N, H, W)) < 0.1,
                         0.0, depth_gt)        # sprinkle invalid pixels

    outputs, vis_metrics = cdrnet_forward(imgs, depth_gt, pixel_mean,
                                          pixel_std, backbone_w)
    jax.block_until_ready(outputs['depth_init'])

    # ---- sanity checks against pure-JAX references -------------------------
    x_flat = imgs.reshape(N, C, H * W)
    feats = backbone2d_project(x_flat, pixel_mean, pixel_std, backbone_w)
    ref_feats = _ref_feats(x_flat, pixel_mean, pixel_std, backbone_w)
    np.testing.assert_allclose(
        np.asarray(feats.astype(jnp.float32)),
        np.asarray(ref_feats), rtol=2e-2, atol=2e-2)            # bf16 rounding

    hw_tile = _pick_hw_tile(H * W, MAX_TILE_COST)
    ref_depth = _ref_depth(feats, hw_tile, DEPTH_START, DEPTH_INTERVAL,
                           N_PLANES, FEAT_DIM)
    np.testing.assert_allclose(
        np.asarray(outputs['depth_init']).reshape(N, H * W),
        np.asarray(ref_depth), rtol=2e-3, atol=2e-3)

    ref_m = _ref_metrics(outputs['depth_init'], depth_gt)
    for k in ref_m:
        np.testing.assert_allclose(
            np.asarray(vis_metrics['initial_depth_metrics'][k]),
            np.asarray(ref_m[k]), rtol=2e-3, atol=2e-3)

    print("KERNEL_OK")
</pallas_src>

<mosaic_0001>
module attributes {stable_mosaic.version = 11 : i64} {
  func.func @_feat_proj_kernel(%arg0: i32, %arg1: i32, %arg2: memref<1x3x256xf32, #tpu.memory_space<vmem>>, %arg3: memref<24x3xf32, #tpu.memory_space<vmem>>, %arg4: memref<24x1xf32, #tpu.memory_space<vmem>>, %arg5: memref<1x24x256xbf16, #tpu.memory_space<vmem>>) attributes {dimension_semantics = [#tpu.dimension_semantics<parallel>, #tpu.dimension_semantics<parallel>], iteration_bounds = array<i64: 3, 1>, scalar_prefetch = 0 : i64, scratch_operands = 0 : i64, tpu.core_type = #tpu.core_type<tc>, window_params = [{transform_indices = @transform_0, window_bounds = array<i64: 1, 3, 256>}, {pipeline_mode = #tpu.pipeline_mode<synchronous>, transform_indices = @transform_1, window_bounds = array<i64: 24, 3>}, {pipeline_mode = #tpu.pipeline_mode<synchronous>, transform_indices = @transform_2, window_bounds = array<i64: 24, 1>}, {transform_indices = @transform_3, window_bounds = array<i64: 1, 24, 256>}]} {
    %c0 = arith.constant 0 : index
    %c0_0 = arith.constant 0 : index
    %c0_1 = arith.constant 0 : index
    %0 = vector.load %arg2[%c0, %c0_0, %c0_1] : memref<1x3x256xf32, #tpu.memory_space<vmem>>, vector<1x3x256xf32>
    %1 = vector.shape_cast %0 : vector<1x3x256xf32> to vector<3x256xf32>
    %c0_2 = arith.constant 0 : index
    %c0_3 = arith.constant 0 : index
    %2 = vector.load %arg3[%c0_2, %c0_3] : memref<24x3xf32, #tpu.memory_space<vmem>>, vector<24x3xf32>
    %3 = vector.extract_strided_slice %2 {offsets = [0, 0], sizes = [24, 1], strides = [1, 1]} : vector<24x3xf32> to vector<24x1xf32>
    %4 = vector.extract_strided_slice %1 {offsets = [0, 0], sizes = [1, 256], strides = [1, 1]} : vector<3x256xf32> to vector<1x256xf32>
    %5 = vector.broadcast %3 : vector<24x1xf32> to vector<24x256xf32>
    %6 = vector.broadcast %4 : vector<1x256xf32> to vector<24x256xf32>
    %7 = arith.mulf %5, %6 : vector<24x256xf32>
    %8 = vector.extract_strided_slice %2 {offsets = [0, 1], sizes = [24, 1], strides = [1, 1]} : vector<24x3xf32> to vector<24x1xf32>
    %9 = vector.extract_strided_slice %1 {offsets = [1, 0], sizes = [1, 256], strides = [1, 1]} : vector<3x256xf32> to vector<1x256xf32>
    %10 = vector.broadcast %8 : vector<24x1xf32> to vector<24x256xf32>
    %11 = vector.broadcast %9 : vector<1x256xf32> to vector<24x256xf32>
    %12 = arith.mulf %10, %11 : vector<24x256xf32>
    %13 = arith.addf %7, %12 : vector<24x256xf32>
    %14 = vector.extract_strided_slice %2 {offsets = [0, 2], sizes = [24, 1], strides = [1, 1]} : vector<24x3xf32> to vector<24x1xf32>
    %15 = vector.extract_strided_slice %1 {offsets = [2, 0], sizes = [1, 256], strides = [1, 1]} : vector<3x256xf32> to vector<1x256xf32>
    %16 = vector.broadcast %14 : vector<24x1xf32> to vector<24x256xf32>
    %17 = vector.broadcast %15 : vector<1x256xf32> to vector<24x256xf32>
    %18 = arith.mulf %16, %17 : vector<24x256xf32>
    %19 = arith.addf %13, %18 : vector<24x256xf32>
    %c0_4 = arith.constant 0 : index
    %c0_5 = arith.constant 0 : index
    %20 = vector.load %arg4[%c0_4, %c0_5] : memref<24x1xf32, #tpu.memory_space<vmem>>, vector<24x1xf32>
    %21 = vector.broadcast %20 : vector<24x1xf32> to vector<24x256xf32>
    %22 = arith.addf %19, %21 : vector<24x256xf32>
    %23 = arith.truncf %22 : vector<24x256xf32> to vector<24x256xbf16>
    %c0_6 = arith.constant 0 : index
    %c0_7 = arith.constant 0 : index
    %c0_8 = arith.constant 0 : index
    %24 = vector.load %arg5[%c0_6, %c0_7, %c0_8] : memref<1x24x256xbf16, #tpu.memory_space<vmem>>, vector<1x24x256xbf16>
    %25 = vector.shape_cast %24 : vector<1x24x256xbf16> to vector<24x256xbf16>
    %26 = vector.shape_cast %23 : vector<24x256xbf16> to vector<1x24x256xbf16>
    tpu.vector_store %arg5[%c0_6, %c0_7, %c0_8], %26 {strides = array<i32>} : memref<1x24x256xbf16, #tpu.memory_space<vmem>>, vector<1x24x256xbf16>,
    return
  }
  func.func @transform_0(%arg0: i32, %arg1: i32) -> (i32, i32, i32) {
    %c0_i32 = arith.constant 0 : i32
    %c0_i32_0 = arith.constant 0 : i32
    return %arg0, %c0_i32, %arg1 : i32, i32, i32
  }
  func.func @transform_1(%arg0: i32, %arg1: i32) -> (i32, i32) {
    %c0_i32 = arith.constant 0 : i32
    %c0_i32_0 = arith.constant 0 : i32
    %c0_i32_1 = arith.constant 0 : i32
    return %c0_i32, %c0_i32_0 : i32, i32
  }
  func.func @transform_2(%arg0: i32, %arg1: i32) -> (i32, i32) {
    %c0_i32 = arith.constant 0 : i32
    %c0_i32_0 = arith.constant 0 : i32
    %c0_i32_1 = arith.constant 0 : i32
    return %c0_i32, %c0_i32_0 : i32, i32
  }
  func.func @transform_3(%arg0: i32, %arg1: i32) -> (i32, i32, i32) {
    %c0_i32 = arith.constant 0 : i32
    %c0_i32_0 = arith.constant 0 : i32
    return %arg0, %c0_i32, %arg1 : i32, i32, i32
  }
}

</mosaic_0001>

<llo_original>
// kernel: tpu_custom_call.1
$region0: #{tpu_custom_call.1}
  #allocation0 [shape = 'u32[]', space=smem, size = 0x4, offset = 0x4, fixed_abs, tag = 'smem constant byte address 0x4 - core index']
  #allocation1 [shape = 'u32[144,128]{1,0:T(1,128)}', space=vmem, size = 0x12000, scoped, tag = 'internal scratch']
  %s0 = inlined_call_operand.vmem [shape: f32[3,3,256], index: 0, kind: input, shape index: {}]
  %s1 = inlined_call_operand.vmem [shape: f32[24,3], index: 1, kind: input, shape index: {}]
  %s2 = inlined_call_operand.vmem [shape: f32[24,1], index: 2, kind: input, shape index: {}]
  %s3 = inlined_call_operand.hbm [shape: bf16[3,24,256], index: 3, kind: output, shape index: {}]
  %s4 = sld [smem:[#allocation0]]
  $region45: #{tpu_custom_call.1} parent=0
    _
  %s6 = ssub.s32 1, %s4
  %s7 = scalar_select 0, %s6, %s4
  $region1: #{tpu_custom_call.1} parent=0
    #allocation2 [shape = 'u8[24576]{0}', space=vmem, size = 0x6000, scoped, tag = 'output window, operand 0']
    #allocation3 [shape = 's32[2]{0}', space=sflag, size = 0x8, scoped, tag = 'scoped memory for tpu_custom_call.1']
    %8 = vsyncpa [#allocation3], 0
    %s9 = scalar_lea.sflag [#allocation3], 1
    %10 = vsyncpa %s9, 0
    loop: start=0, step=1, limit=5
    $region2: #{tpu_custom_call.1} parent=1 // loop_pre_header
      _
    $region3: #{tpu_custom_call.1} parent=1 // loop_header
      %s12 = sphi 0, %s16
      %p13 = scmp.ge.s32.totalorder %s12, 5
      %s19 = sphi 0, %s31
      %s20 = sphi 0, %s27
      %s21 = sphi 0, %s19
      %s22 = sphi 0, %s20
      %s23 = sphi 0, %s21
      %s24 = sphi 0, %s22
      %s36 = sphi 0, %s38
      %s39 = sphi 0, %s36
      %s40 = sphi 0, %s39
      %s56 = sphi 0, %s40
      %s60 = sphi 0, %s60
      %s62 = sphi 0, %s60
      %s63 = sphi 0, %s62
      %s77 = sphi 0, %s63
      %s81 = sphi 0, %s81
      %s83 = sphi 0, %s81
      %s84 = sphi 0, %s83
      %s98 = sphi 0, %s84
      %s106 = sphi 0, %s108
      %s109 = sphi 0, %s106
      %s110 = sphi 0, %s109
      %s126 = sphi 0, %s110
    $region4: #{tpu_custom_call.1} parent=1 // loop_header_branch
      %15 = sbr.rel (%p13) target = $region8
    $region5: #{tpu_custom_call.1} parent=1 // loop_body
      %s17 = ssub.s32 %s12, 1
      %s18 = ssub.s32 %s12, 2
      %s25 = sadd.s32 1, %s20
      %p26 = scmp.ge.s32.totalorder %s25, 1
      %s27 = scalar_select %p26, 0, %s25
      %s28 = sadd.s32 1, %s19
      %s29 = scalar_select %p26, %s28, %s19
      %p30 = scmp.ge.s32.totalorder %s29, 3
      %s31 = scalar_select %p30, 0, %s29
      %s32 = ssub.s32 %s19, %s31
      %s33 = ssub.s32 %s20, %s27
      %s34 = sor.u32 %s32, %s33
      %p35 = scmp.eq.s32.totalorder %s34, 0
      %s37 = sadd.s32 %s36, 1
      %s38 = scalar_select %p35, %s36, %s37
      %p41 = pneg %p35
      %p42 = scmp.eq.s32.totalorder %s12, 2
      %p43 = por %p41, %p42
      %p44 = scmp.ne.s32.totalorder %s36, %s39
      %p45 = scmp.eq.s32.totalorder %s12, 0
      %p46 = por %p44, %p45
      %p47 = scmp.ne.s32.totalorder %s36, %s39
      %p48 = scmp.eq.s32.totalorder %s17, 2
      %p49 = por %p47, %p48
      %p50 = scmp.ne.s32.totalorder %s39, %s40
      %p51 = scmp.eq.s32.totalorder %s17, 0
      %p52 = por %p50, %p51
      %p53 = scmp.ne.s32.totalorder %s39, %s40
      %p54 = scmp.eq.s32.totalorder %s18, 2
      %p55 = por %p53, %p54
      %p57 = scmp.ne.s32.totalorder %s40, %s56
      %p58 = scmp.eq.s32.totalorder %s18, 0
      %p59 = por %p57, %p58
      %s61 = sadd.s32 %s60, 1
      %p64 = scmp.eq.s32.totalorder %s12, 2
      %p65 = scmp.ne.s32.totalorder %s60, %s62
      %p66 = scmp.eq.s32.totalorder %s12, 0
      %p67 = por %p65, %p66
      %p68 = scmp.ne.s32.totalorder %s60, %s62
      %p69 = scmp.eq.s32.totalorder %s17, 2
      %p70 = por %p68, %p69
      %p71 = scmp.ne.s32.totalorder %s62, %s63
      %p72 = scmp.eq.s32.totalorder %s17, 0
      %p73 = por %p71, %p72
      %p74 = scmp.ne.s32.totalorder %s62, %s63
      %p75 = scmp.eq.s32.totalorder %s18, 2
      %p76 = por %p74, %p75
      %p78 = scmp.ne.s32.totalorder %s63, %s77
      %p79 = scmp.eq.s32.totalorder %s18, 0
      %p80 = por %p78, %p79
      %s82 = sadd.s32 %s81, 1
      %p85 = scmp.eq.s32.totalorder %s12, 2
      %p86 = scmp.ne.s32.totalorder %s81, %s83
      %p87 = scmp.eq.s32.totalorder %s12, 0
      %p88 = por %p86, %p87
      %p89 = scmp.ne.s32.totalorder %s81, %s83
      %p90 = scmp.eq.s32.totalorder %s17, 2
      %p91 = por %p89, %p90
      %p92 = scmp.ne.s32.totalorder %s83, %s84
      %p93 = scmp.eq.s32.totalorder %s17, 0
      %p94 = por %p92, %p93
      %p95 = scmp.ne.s32.totalorder %s83, %s84
      %p96 = scmp.eq.s32.totalorder %s18, 2
      %p97 = por %p95, %p96
      %p99 = scmp.ne.s32.totalorder %s84, %s98
      %p100 = scmp.eq.s32.totalorder %s18, 0
      %p101 = por %p99, %p100
      %s102 = ssub.s32 %s19, %s31
      %s103 = ssub.s32 %s20, %s27
      %s104 = sor.u32 %s102, %s103
      %p105 = scmp.eq.s32.totalorder %s104, 0
      %s107 = sadd.s32 %s106, 1
      %s108 = scalar_select %p105, %s106, %s107
      %p111 = pneg %p105
      %p112 = scmp.eq.s32.totalorder %s12, 2
      %p113 = por %p111, %p112
      %p114 = scmp.ne.s32.totalorder %s106, %s109
      %p115 = scmp.eq.s32.totalorder %s12, 0
      %p116 = por %p114, %p115
      %p117 = scmp.ne.s32.totalorder %s106, %s109
      %p118 = scmp.eq.s32.totalorder %s17, 2
      %p119 = por %p117, %p118
      %p120 = scmp.ne.s32.totalorder %s109, %s110
      %p121 = scmp.eq.s32.totalorder %s17, 0
      %p122 = por %p120, %p121
      %p123 = scmp.ne.s32.totalorder %s109, %s110
      %p124 = scmp.eq.s32.totalorder %s18, 2
      %p125 = por %p123, %p124
      %p127 = scmp.ne.s32.totalorder %s110, %s126
      %p128 = scmp.eq.s32.totalorder %s18, 0
      %p129 = por %p127, %p128
      %p130 = scmp.le.s32.totalorder 1, %s12
      %p131 = scmp.lt.s32.totalorder %s12, 4
      %p132 = pnand %p130, %p131
      %p133 = pneg %p132
      // Predicated region
      $region9: #{tpu_custom_call.1} parent=5 // pred_check
        _
      $region10: #{tpu_custom_call.1} parent=5 // pred_check_branch
        %135 = sbr.rel (%p132) target = $region12
      $region11: #{tpu_custom_call.1} parent=5 // pred_region
        %s136 = ssub.s32 %s12, 1
        // Predicated region
        $region13: #{tpu_custom_call.1} parent=11 // pred_check
          %p137 = pneg %p73
        $region14: #{tpu_custom_call.1} parent=11 // pred_check_branch
          %139 = sbr.rel (%p137) target = $region16
        $region15: #{tpu_custom_call.1} parent=11 // pred_region
          _
        $region16: #{tpu_custom_call.1} parent=11 // pred_fallthru
          _
        // Predicated region
        $region17: #{tpu_custom_call.1} parent=11 // pred_check
          %p140 = pneg %p94
        $region18: #{tpu_custom_call.1} parent=11 // pred_check_branch
          %142 = sbr.rel (%p140) target = $region20
        $region19: #{tpu_custom_call.1} parent=11 // pred_region
          _
        $region20: #{tpu_custom_call.1} parent=11 // pred_fallthru
          _
      $region12: #{tpu_custom_call.1} parent=5 // pred_fallthru
        _
      %p143 = scmp.lt.s32.totalorder %s12, 3
      // Predicated region
      $region21: #{tpu_custom_call.1} parent=5 // pred_check
        %p144 = pneg %p143
      $region22: #{tpu_custom_call.1} parent=5 // pred_check_branch
        %146 = sbr.rel (%p144) target = $region24
      $region23: #{tpu_custom_call.1} parent=5 // pred_region
        // Predicated region
        $region25: #{tpu_custom_call.1} parent=23 // pred_check
          %p147 = pneg %p46
        $region26: #{tpu_custom_call.1} parent=23 // pred_check_branch
          %149 = sbr.rel (%p147) target = $region28
        $region27: #{tpu_custom_call.1} parent=23 // pred_region
          %s150 = smul.u32 2, %s20
          %p151 = scmp.lt.s32.totalorder %s19, 2
          %s152 = scalar_select %p151, %s19, 2
          %p153 = scmp.lt.s32.totalorder %s150, 1
          %s154 = scalar_select %p153, %s150, 1
          %s155 = smul.addr %s152, 2
          %s156 = sadd.s32 %s154, %s155
          %s157 = smul.addr %s156, 4
          %s158 = scalar_lea.vmem %s0, %s157
          %s159 = smul.u32 2, %s20
        $region28: #{tpu_custom_call.1} parent=23 // pred_fallthru
          _
      $region24: #{tpu_custom_call.1} parent=5 // pred_fallthru
        _
      %p160 = scmp.le.s32.totalorder 1, %s12
      %p161 = scmp.lt.s32.totalorder %s12, 4
      %p162 = pnand %p160, %p161
      %p163 = pneg %p162
      // Predicated region
      $region29: #{tpu_custom_call.1} parent=5 // pred_check
        _
      $region30: #{tpu_custom_call.1} parent=5 // pred_check_branch
        %165 = sbr.rel (%p162) target = $region32
      $region31: #{tpu_custom_call.1} parent=5 // pred_region
        %s166 = ssub.s32 %s12, 1
        %s167 = smul.u32 2, %s22
        %p168 = scmp.lt.s32.totalorder %s21, 2
        %s169 = scalar_select %p168, %s21, 2
        %p170 = scmp.lt.s32.totalorder %s167, 1
        %s171 = scalar_select %p170, %s167, 1
        %s172 = smul.addr %s169, 2
        %s173 = sadd.s32 %s171, %s172
        %s174 = smul.addr %s173, 4
        %s175 = scalar_lea.vmem %s0, %s174
        %p176 = pneg %p52
        %p177 = pneg %p49
        %p178 = pneg %p73
        %p179 = pneg %p70
        %p180 = pneg %p94
        %p181 = pneg %p91
        %p182 = pneg %p122
        %p183 = pneg %p119
        %s184 = sand.u32 %s109, 1
        %s185 = scalar_lea.sflag [#allocation3], %s184
        %s186 = sand.u32 %s109, 1
        %s187 = smul.addr %s186, 24
        %s188 = scalar_lea.vmem [#allocation2], %s187
        %s189 = smul.u32 2, %s22
        %p190 = scmp.lt.s32.totalorder %s21, 2
        %s191 = scalar_select %p190, %s21, 2
        %p192 = scmp.lt.s32.totalorder %s189, 1
        %s193 = scalar_select %p192, %s189, 1
        %s194 = smul.addr %s191, 2
        %s195 = sadd.s32 %s193, %s194
        %s196 = smul.addr %s195, 4
        %s197 = scalar_lea.vmem %s0, %s196
        %s198 = smul.u32 2, %s22
        %s199 = smul.u32 2, %s22
        %v200 = vld [vmem:[%s197] sm:$0x77]
        %v201 = vld [vmem:[%s1] sm:$0xff]
        %v202 = vld [vmem:[%s1 + $0x8] sm:$0xff]
        %v203 = vld [vmem:[%s1 + $0x10] sm:$0xff]
        %205 = vset.pattern.permute.xlu0 0
        %206 = vperm.xlu0 %205, %v201
        %v207 = vpop.permute.xlu0 %206
        %210 = vset.pattern.permute.xlu0 0
        %211 = vperm.xlu0 %210, %v202
        %v212 = vpop.permute.xlu0 %211
        %215 = vset.pattern.permute.xlu0 0
        %216 = vperm.xlu0 %215, %v203
        %v217 = vpop.permute.xlu0 %216
        %v220 = vlaneseq
        %v221 = vshrl.u32 %v220, 7
        %v222 = vsub.s32 0, %v221
        %v223 = vrot.slane %v200, %v222
        %v224 = vlaneseq
        %v225 = vshrl.u32 %v224, 7
        %v226 = vsub.s32 4, %v225
        %v227 = vrot.slane %v200, %v226
        %v230 = vlaneseq
        %v231 = vshrl.u32 %v230, 7
        %v232 = vsub.s32 0, %v231
        %v233 = vrot.slane %v223, %v232
        %v234 = vlaneseq
        %v235 = vshrl.u32 %v234, 7
        %v236 = vsub.s32 0, %v235
        %v237 = vrot.slane %v227, %v236
        %v238 = vmul.f32 %v207, %v233
        %v239 = vmul.f32 %v207, %v237
        %v240 = vmul.f32 %v212, %v233
        %v241 = vmul.f32 %v212, %v237
        %v242 = vmul.f32 %v217, %v233
        %v243 = vmul.f32 %v217, %v237
        %244 = vset.pattern.permute.xlu0 1
        %245 = vperm.xlu0 %244, %v201
        %v246 = vpop.permute.xlu0 %245
        %248 = vset.pattern.permute.xlu0 1
        %249 = vperm.xlu0 %248, %v202
        %v250 = vpop.permute.xlu0 %249
        %252 = vset.pattern.permute.xlu0 1
        %253 = vperm.xlu0 %252, %v203
        %v254 = vpop.permute.xlu0 %253
        %v256 = vlaneseq
        %v257 = vshrl.u32 %v256, 7
        %v258 = vsub.s32 1, %v257
        %v259 = vrot.slane %v200, %v258
        %v260 = vlaneseq
        %v261 = vshrl.u32 %v260, 7
        %v262 = vsub.s32 5, %v261
        %v263 = vrot.slane %v200, %v262
        %v266 = vlaneseq
        %v267 = vshrl.u32 %v266, 7
        %v268 = vsub.s32 1, %v267
        %v269 = vrot.slane %v259, %v268
        %v270 = vlaneseq
        %v271 = vshrl.u32 %v270, 7
        %v272 = vsub.s32 1, %v271
        %v273 = vrot.slane %v263, %v272
        %v274 = vmul.f32 %v246, %v269
        %v275 = vmul.f32 %v246, %v273
        %v276 = vmul.f32 %v250, %v269
        %v277 = vmul.f32 %v250, %v273
        %v278 = vmul.f32 %v254, %v269
        %v279 = vmul.f32 %v254, %v273
        %v280 = vadd.f32 %v238, %v274
        %v281 = vadd.f32 %v239, %v275
        %v282 = vadd.f32 %v240, %v276
        %v283 = vadd.f32 %v241, %v277
        %v284 = vadd.f32 %v242, %v278
        %v285 = vadd.f32 %v243, %v279
        %286 = vset.pattern.permute.xlu0 2
        %287 = vperm.xlu0 %286, %v201
        %v288 = vpop.permute.xlu0 %287
        %290 = vset.pattern.permute.xlu0 2
        %291 = vperm.xlu0 %290, %v202
        %v292 = vpop.permute.xlu0 %291
        %294 = vset.pattern.permute.xlu0 2
        %295 = vperm.xlu0 %294, %v203
        %v296 = vpop.permute.xlu0 %295
        %v298 = vlaneseq
        %v299 = vshrl.u32 %v298, 7
        %v300 = vsub.s32 2, %v299
        %v301 = vrot.slane %v200, %v300
        %v302 = vlaneseq
        %v303 = vshrl.u32 %v302, 7
        %v304 = vsub.s32 6, %v303
        %v305 = vrot.slane %v200, %v304
        %v308 = vlaneseq
        %v309 = vshrl.u32 %v308, 7
        %v310 = vsub.s32 2, %v309
        %v311 = vrot.slane %v301, %v310
        %v312 = vlaneseq
        %v313 = vshrl.u32 %v312, 7
        %v314 = vsub.s32 2, %v313
        %v315 = vrot.slane %v305, %v314
        %v316 = vmul.f32 %v288, %v311
        %v317 = vmul.f32 %v288, %v315
        %v318 = vmul.f32 %v292, %v311
        %v319 = vmul.f32 %v292, %v315
        %v320 = vmul.f32 %v296, %v311
        %v321 = vmul.f32 %v296, %v315
        %v322 = vadd.f32 %v280, %v316
        %v323 = vadd.f32 %v281, %v317
        %v324 = vadd.f32 %v282, %v318
        %v325 = vadd.f32 %v283, %v319
        %v326 = vadd.f32 %v284, %v320
        %v327 = vadd.f32 %v285, %v321
        %v328 = vld [vmem:[%s2] sm:$0xff]
        %v329 = vld [vmem:[%s2 + $0x8] sm:$0xff]
        %v330 = vld [vmem:[%s2 + $0x10] sm:$0xff]
        %332 = vset.pattern.permute.xlu0 0
        %333 = vperm.xlu0 %332, %v328
        %v334 = vpop.permute.xlu0 %333
        %337 = vset.pattern.permute.xlu0 0
        %338 = vperm.xlu0 %337, %v329
        %v339 = vpop.permute.xlu0 %338
        %342 = vset.pattern.permute.xlu0 0
        %343 = vperm.xlu0 %342, %v330
        %v344 = vpop.permute.xlu0 %343
        %v346 = vadd.f32 %v322, %v334
        %v347 = vadd.f32 %v323, %v334
        %v348 = vadd.f32 %v324, %v339
        %v349 = vadd.f32 %v325, %v339
        %v350 = vadd.f32 %v326, %v344
        %v351 = vadd.f32 %v327, %v344
        %v352 = vpack.c.bf16 %v348, %v346
        %v353 = vpack.c.bf16 %v349, %v347
        %v354 = vpack.c.bf16 %v350, %v350
        %v355 = vpack.c.bf16 %v351, %v351
        %v360 = vunpack.c.l.b16 %v352
        %v361 = vunpack.c.l.b16 %v353
        %v362 = vunpack.c.h.b16 %v352
        %v363 = vunpack.c.h.b16 %v353
        %v364 = vunpack.c.l.b16 %v354
        %v365 = vunpack.c.l.b16 %v355
        %v366 = vpack.c.b16 %v361, %v360
        %v367 = vpack.c.b16 %v363, %v362
        %v368 = vpack.c.b16 %v365, %v364
        %372 = vst [vmem:[%s188] sm:$0xff] %v366
        %373 = vst [vmem:[%s188 + $0x8] sm:$0xff] %v367
        %374 = vst [vmem:[%s188 + $0x10] sm:$0xff] %v368
        %s375 = sand.u32 %s109, 1
        %s376 = scalar_lea.sflag [#allocation3], %s375
        %s377 = sand.u32 %s109, 1
        %s378 = smul.addr %s377, 24
        %s379 = scalar_lea.vmem [#allocation2], %s378
        // Predicated region
        $region33: #{tpu_custom_call.1} parent=31 // pred_check
          %p380 = pneg %p119
        $region34: #{tpu_custom_call.1} parent=31 // pred_check_branch
          %382 = sbr.rel (%p380) target = $region36
        $region35: #{tpu_custom_call.1} parent=31 // pred_region
          %s383 = smul.u32 2, %s22
          %s385 = ssub.s32 384, 384
          %386 = vsyncadd %s376, %s385
          %s387 = smul.addr %s21, 6
          %s388 = sadd.s32 %s383, %s387
          %s389 = smul.addr %s388, 64
          %s390 = scalar_lea.hbm %s3, %s389
          %s391 = sshll.u32 %s379, 4
          %s392 = int_to_ptr.vmem [resolvable:$true] %s391
          %397 = dma.vmem_to_hbm [thread:$0]  %s392, 384, %s390, %s376, 128, 128, 8
        $region36: #{tpu_custom_call.1} parent=31 // pred_fallthru
          _
      $region32: #{tpu_custom_call.1} parent=5 // pred_fallthru
        _
      %p398 = scmp.le.s32.totalorder 2, %s12
      // Predicated region
      $region37: #{tpu_custom_call.1} parent=5 // pred_check
        %p399 = pneg %p398
      $region38: #{tpu_custom_call.1} parent=5 // pred_check_branch
        %401 = sbr.rel (%p399) target = $region40
      $region39: #{tpu_custom_call.1} parent=5 // pred_region
        %s402 = ssub.s32 %s12, 2
        // Predicated region
        $region41: #{tpu_custom_call.1} parent=39 // pred_check
          %p403 = pneg %p125
        $region42: #{tpu_custom_call.1} parent=39 // pred_check_branch
          %405 = sbr.rel (%p403) target = $region44
        $region43: #{tpu_custom_call.1} parent=39 // pred_region
          %s406 = sand.u32 %s110, 1
          %s407 = scalar_lea.sflag [#allocation3], %s406
          %s408 = sand.u32 %s110, 1
          %s409 = smul.addr %s408, 24
          %s410 = scalar_lea.vmem [#allocation2], %s409
          %411 = dma.done %s407, 384
        $region44: #{tpu_custom_call.1} parent=39 // pred_fallthru
          _
      $region40: #{tpu_custom_call.1} parent=5 // pred_fallthru
        _
    $region6: #{tpu_custom_call.1} parent=1 // loop_footer
      %s16 = sadd.s32 1, %s12
    $region7: #{tpu_custom_call.1} parent=1 // loop_footer_branch
      %11 = sbr.rel target = $region3
    $region8: #{tpu_custom_call.1} parent=1 // loop_exit
      _
    %412 = vsyncpa [#allocation3], 1
    %s413 = scalar_lea.sflag [#allocation3], 1
    %414 = vsyncpa %s413, 1

</llo_original>
